<compile_context>
chip_gen: v7x
topology: tpu7x:2x2x1
jax: 0.10.0
libtpu: 0.0.40
codegen_flags: <defaults>
</compile_context>

<pallas_src>
import functools

import jax
import jax.numpy as jnp
from jax import lax
from jax.experimental import pallas as pl
from jax.experimental.pallas import tpu as pltpu

LANE = 128


def _round_up(x, m):
    return ((x + m - 1) // m) * m


def _row_block(bn, cap=512):
    """Largest divisor of bn that is <= cap (single grid step for small problems)."""
    if bn <= cap:
        return bn
    for tm in range(cap, 0, -1):
        if bn % tm == 0:
            return tm
    return bn


# -----------------------------------------------------------------------------
# Fused kernel:
#   H_data rows = softmax( (P @ W_comb + b_comb) @ K^T )  over the edge axis
#   H_geo       = A @ G_l   (computed once, grid step 0)
# -----------------------------------------------------------------------------
def _fused_kernel(p_ref, w_ref, b_ref, kt_ref, a_ref, gl_ref,
                  h_data_ref, h_geo_ref, *, num_edges):
    # --- data-driven incidence on this row block -----------------------------
    p = p_ref[...]                                                    # (TM, P) f32
    # Q_scaled = P @ W_comb + b_comb (W_comb already folds W_emb, W_Q, 1/sqrt(D))
    q = jnp.dot(p.astype(jnp.bfloat16), w_ref[...],
                preferred_element_type=jnp.float32) + b_ref[...]      # (TM, D)
    # scores against pre-projected, pre-transposed hyperedge keys
    s = jnp.dot(q.astype(jnp.bfloat16), kt_ref[...],
                preferred_element_type=jnp.float32)                   # (TM, Mp)
    mp = s.shape[-1]
    if mp > num_edges:  # static: mask padded lanes so they carry no probability
        col = lax.broadcasted_iota(jnp.int32, s.shape, 1)
        s = jnp.where(col < num_edges, s, jnp.float32(-1e30))
    s = s - jnp.max(s, axis=-1, keepdims=True)
    ex = jnp.exp(s)
    denom = jnp.sum(ex, axis=-1, keepdims=True)
    h_data_ref[...] = ex * pl.reciprocal(denom, approx=True)

    # --- geography-driven incidence (batch-invariant, do it once) ------------
    @pl.when(pl.program_id(0) == 0)
    def _():
        h_geo_ref[...] = jnp.dot(a_ref[...], gl_ref[...],
                                 preferred_element_type=jnp.float32)


# -----------------------------------------------------------------------------
# One-time parameter preprocessing (do NOT call per forward pass).
# -----------------------------------------------------------------------------
def prepare_params(params):
    he = params["hyperedge_emb"]            # (M, D)
    gl = params["G_l"]                      # (N, M)
    wq = params["wq"]                       # (D, D) torch layout (out, in)
    wk = params["wk"]                       # (D, D)
    w_emb = params["lin_node_w"]            # (D, P) torch layout (out, in)
    b_emb = params["lin_node_b"]            # (D,)

    M, D = he.shape
    N = gl.shape[0]
    Mp = _round_up(M, LANE)
    inv_sqrt_d = 1.0 / jnp.sqrt(jnp.float32(D))
    hp = jax.lax.Precision.HIGHEST

    # Q = (P @ W_emb^T + b) @ W_Q^T  ==  P @ W_comb + b_comb, with 1/sqrt(D) folded.
    w_comb = jnp.dot(w_emb.T, wq.T, precision=hp) * inv_sqrt_d           # (P, D)
    b_comb = jnp.dot(b_emb[None, :], wq.T, precision=hp) * inv_sqrt_d    # (1, D)
    # K^T = (hyperedge_emb @ W_K^T)^T, zero-padded to lane width.
    kt = jnp.dot(he, wk.T, precision=hp).T                               # (D, M)
    kt = jnp.pad(kt, ((0, 0), (0, Mp - M)))                              # (D, Mp)
    gl_pad = jnp.pad(gl, ((0, 0), (0, Mp - M)))                          # (N, Mp)

    return {
        "w_comb": w_comb.astype(jnp.bfloat16),
        "b_comb": b_comb.astype(jnp.float32),
        "kT": kt.astype(jnp.bfloat16),
        "g_l_pad": gl_pad.astype(jnp.float32),
        "num_edges": M,
        "num_nodes": N,
        "embed_dim": D,
    }


# -----------------------------------------------------------------------------
# Forward wrapper (matches HyperGraphConstructor.forward(P_last, A)).
# -----------------------------------------------------------------------------
def hypergraph_constructor(P_last, A, prep):
    B, N, P = P_last.shape
    D = prep["embed_dim"]
    M = prep["num_edges"]
    Mp = prep["kT"].shape[1]
    BN = B * N
    TM = _row_block(BN)
    G = BN // TM

    p_flat = P_last.reshape(BN, P)

    flops = 2 * BN * P * D + 2 * BN * D * Mp + 2 * N * N * Mp + 5 * BN * Mp
    transcendentals = BN * Mp + BN
    bytes_accessed = (4 * (BN * P + D + N * N + N * Mp + BN * Mp + N * Mp)
                      + 2 * (P * D + D * Mp))
    cost = pl.CostEstimate(flops=flops, transcendentals=transcendentals,
                           bytes_accessed=bytes_accessed)

    h_data_pad, h_geo_pad = pl.pallas_call(
        functools.partial(_fused_kernel, num_edges=M),
        out_shape=(jax.ShapeDtypeStruct((BN, Mp), jnp.float32),
                   jax.ShapeDtypeStruct((N, Mp), jnp.float32)),
        grid_spec=pltpu.PrefetchScalarGridSpec(
            num_scalar_prefetch=0,
            grid=(G,),
            in_specs=[
                pl.BlockSpec((TM, P), lambda i: (i, 0)),    # node patches (row block)
                pl.BlockSpec((P, D), lambda i: (0, 0)),     # fused W_comb
                pl.BlockSpec((1, D), lambda i: (0, 0)),     # fused bias
                pl.BlockSpec((D, Mp), lambda i: (0, 0)),    # K^T (pre-projected, padded)
                pl.BlockSpec((N, N), lambda i: (0, 0)),     # A
                pl.BlockSpec((N, Mp), lambda i: (0, 0)),    # G_l (padded)
            ],
            out_specs=[
                pl.BlockSpec((TM, Mp), lambda i: (i, 0)),   # H_data rows (lane-dense)
                pl.BlockSpec((N, Mp), lambda i: (0, 0)),    # H_geo (resident, pid 0)
            ],
        ),
        # H_geo's out block is revisited across the grid -> axis must be arbitrary.
        compiler_params=pltpu.CompilerParams(
            dimension_semantics=("arbitrary",)),
        cost_estimate=cost,
    )(p_flat, prep["w_comb"], prep["b_comb"], prep["kT"], A, prep["g_l_pad"])

    h_data = h_data_pad[:, :M].reshape(B, N, M)
    h_geo = h_geo_pad[:, :M]
    return h_data, h_geo


def reference(P_last, A, params):
    """Plain-JAX reference (module semantics, f32)."""
    E = P_last @ params["lin_node_w"].T + params["lin_node_b"]
    Q = E @ params["wq"].T
    K = params["hyperedge_emb"] @ params["wk"].T
    S = (Q @ K.T) / jnp.sqrt(jnp.float32(E.shape[-1]))
    H_data = jax.nn.softmax(S, axis=-1)
    H_geo = A @ params["G_l"]
    return H_data, H_geo


if __name__ == "__main__":
    # small, module-consistent shapes
    B = 2            # batch
    N = 16           # num_nodes
    M = 8            # num_edges
    D = 32           # local_embed_dim
    PATCH = 8        # patch_size

    key = jax.random.PRNGKey(0)
    keys = jax.random.split(key, 8)

    params = {
        "hyperedge_emb": jax.random.normal(keys[0], (M, D), jnp.float32),
        "G_l":           jax.random.normal(keys[1], (N, M), jnp.float32),
        "wq":            jax.random.normal(keys[2], (D, D), jnp.float32) * 0.1,
        "wk":            jax.random.normal(keys[3], (D, D), jnp.float32) * 0.1,
        "lin_node_w":    jax.random.normal(keys[4], (D, PATCH), jnp.float32) * 0.1,
        "lin_node_b":    jax.random.normal(keys[5], (D,), jnp.float32) * 0.1,
    }

    P_last = jax.random.normal(keys[6], (B, N, PATCH), jnp.float32)
    A = jax.random.normal(keys[7], (N, N), jnp.float32)

    prep = prepare_params(params)              # one-time preprocessing
    h_data, h_geo = hypergraph_constructor(P_last, A, prep)
    jax.block_until_ready((h_data, h_geo))

    h_data_ref, h_geo_ref = reference(P_last, A, params)
    assert h_data.shape == (B, N, M) and h_geo.shape == (N, M)
    # h_data: bf16 matmuls + approx reciprocal vs f32 reference
    assert jnp.allclose(h_data, h_data_ref, atol=5e-3, rtol=5e-3), (
        float(jnp.max(jnp.abs(h_data - h_data_ref))))
    # h_geo: f32 MXU matmul vs XLA f32 matmul (tolerate precision-mode deltas)
    assert jnp.allclose(h_geo, h_geo_ref, atol=5e-2, rtol=2e-2), (
        float(jnp.max(jnp.abs(h_geo - h_geo_ref))))

    print("KERNEL_OK")
</pallas_src>

<mosaic_0001>
module attributes {stable_mosaic.version = 11 : i64} {
  func.func @_fused_kernel(%arg0: i32, %arg1: memref<32x8xf32, #tpu.memory_space<vmem>>, %arg2: memref<8x32xbf16, #tpu.memory_space<vmem>>, %arg3: memref<1x32xf32, #tpu.memory_space<vmem>>, %arg4: memref<32x128xbf16, #tpu.memory_space<vmem>>, %arg5: memref<16x16xf32, #tpu.memory_space<vmem>>, %arg6: memref<16x128xf32, #tpu.memory_space<vmem>>, %arg7: memref<32x128xf32, #tpu.memory_space<vmem>>, %arg8: memref<16x128xf32, #tpu.memory_space<vmem>>) attributes {dimension_semantics = [#tpu.dimension_semantics<arbitrary>], iteration_bounds = array<i64: 1>, scalar_prefetch = 0 : i64, scratch_operands = 0 : i64, tpu.core_type = #tpu.core_type<tc>, window_params = [{transform_indices = @transform_0, window_bounds = array<i64: 32, 8>}, {pipeline_mode = #tpu.pipeline_mode<synchronous>, transform_indices = @transform_1, window_bounds = array<i64: 8, 32>}, {pipeline_mode = #tpu.pipeline_mode<synchronous>, transform_indices = @transform_2, window_bounds = array<i64: 1, 32>}, {pipeline_mode = #tpu.pipeline_mode<synchronous>, transform_indices = @transform_3, window_bounds = array<i64: 32, 128>}, {pipeline_mode = #tpu.pipeline_mode<synchronous>, transform_indices = @transform_4, window_bounds = array<i64: 16, 16>}, {pipeline_mode = #tpu.pipeline_mode<synchronous>, transform_indices = @transform_5, window_bounds = array<i64: 16, 128>}, {transform_indices = @transform_6, window_bounds = array<i64: 32, 128>}, {pipeline_mode = #tpu.pipeline_mode<synchronous>, transform_indices = @transform_7, window_bounds = array<i64: 16, 128>}]} {
    %c0 = arith.constant 0 : index
    %c0_0 = arith.constant 0 : index
    %0 = vector.load %arg1[%c0, %c0_0] : memref<32x8xf32, #tpu.memory_space<vmem>>, vector<32x8xf32>
    %1 = arith.truncf %0 : vector<32x8xf32> to vector<32x8xbf16>
    %c0_1 = arith.constant 0 : index
    %c0_2 = arith.constant 0 : index
    %2 = vector.load %arg2[%c0_1, %c0_2] : memref<8x32xbf16, #tpu.memory_space<vmem>>, vector<8x32xbf16>
    %cst = arith.constant dense<0.000000e+00> : vector<32x32xf32>
    %3 = tpu.matmul %1, %2, %cst {dimension_numbers = #tpu.dot_dimension_numbers<[1], [0], [0], [1], [0, 0, 1, 1], [], []>} : vector<32x8xbf16>, vector<8x32xbf16>, vector<32x32xf32> -> vector<32x32xf32>
    %c0_3 = arith.constant 0 : index
    %c0_4 = arith.constant 0 : index
    %4 = vector.load %arg3[%c0_3, %c0_4] : memref<1x32xf32, #tpu.memory_space<vmem>>, vector<1x32xf32>
    %5 = vector.broadcast %4 : vector<1x32xf32> to vector<32x32xf32>
    %6 = arith.addf %3, %5 : vector<32x32xf32>
    %7 = arith.truncf %6 : vector<32x32xf32> to vector<32x32xbf16>
    %c0_5 = arith.constant 0 : index
    %c0_6 = arith.constant 0 : index
    %8 = vector.load %arg4[%c0_5, %c0_6] : memref<32x128xbf16, #tpu.memory_space<vmem>>, vector<32x128xbf16>
    %cst_7 = arith.constant dense<0.000000e+00> : vector<32x128xf32>
    %9 = tpu.matmul %7, %8, %cst_7 {dimension_numbers = #tpu.dot_dimension_numbers<[1], [0], [0], [1], [0, 0, 1, 1], [], []>} : vector<32x32xbf16>, vector<32x128xbf16>, vector<32x128xf32> -> vector<32x128xf32>
    %10 = tpu.iota {dimensions = array<i32: 1>} : vector<32x128xi32>
    %c8_i32 = arith.constant 8 : i32
    %11 = vector.broadcast %c8_i32 : i32 to vector<32x128xi32>
    %12 = arith.cmpi slt, %10, %11 : vector<32x128xi32>
    %cst_8 = arith.constant -1.000000e+30 : f32
    %13 = vector.broadcast %cst_8 : f32 to vector<32x128xf32>
    %14 = arith.select %12, %9, %13 : vector<32x128xi1>, vector<32x128xf32>
    %cst_9 = arith.constant dense<0xFF800000> : vector<32xf32>
    %15 = vector.multi_reduction <maximumf>, %14, %cst_9 [1] : vector<32x128xf32> to vector<32xf32>
    %16 = vector.shape_cast %15 : vector<32xf32> to vector<32x1xf32>
    %17 = vector.broadcast %16 : vector<32x1xf32> to vector<32x128xf32>
    %18 = arith.subf %14, %17 : vector<32x128xf32>
    %19 = math.exp %18 : vector<32x128xf32>
    %cst_10 = arith.constant dense<0.000000e+00> : vector<32xf32>
    %20 = vector.multi_reduction <add>, %19, %cst_10 [1] : vector<32x128xf32> to vector<32xf32>
    %21 = vector.shape_cast %20 : vector<32xf32> to vector<32x1xf32>
    %22 = tpu.reciprocal %21 {approx = true} : vector<32x1xf32> -> vector<32x1xf32>
    %23 = vector.broadcast %22 : vector<32x1xf32> to vector<32x128xf32>
    %24 = arith.mulf %19, %23 : vector<32x128xf32>
    %c0_11 = arith.constant 0 : index
    %c0_12 = arith.constant 0 : index
    %25 = vector.load %arg7[%c0_11, %c0_12] : memref<32x128xf32, #tpu.memory_space<vmem>>, vector<32x128xf32>
    tpu.vector_store %arg7[%c0_11, %c0_12], %24 {strides = array<i32>} : memref<32x128xf32, #tpu.memory_space<vmem>>, vector<32x128xf32>,
    %c0_i32 = arith.constant 0 : i32
    %26 = arith.cmpi eq, %arg0, %c0_i32 : i32
    %27 = arith.extui %26 : i1 to i32
    %c0_i32_13 = arith.constant 0 : i32
    %28 = arith.cmpi ne, %27, %c0_i32_13 : i32
    scf.if %28 {
      %c0_14 = arith.constant 0 : index
      %c0_15 = arith.constant 0 : index
      %29 = vector.load %arg5[%c0_14, %c0_15] : memref<16x16xf32, #tpu.memory_space<vmem>>, vector<16x16xf32>
      %c0_16 = arith.constant 0 : index
      %c0_17 = arith.constant 0 : index
      %30 = vector.load %arg6[%c0_16, %c0_17] : memref<16x128xf32, #tpu.memory_space<vmem>>, vector<16x128xf32>
      %cst_18 = arith.constant dense<0.000000e+00> : vector<16x128xf32>
      %31 = tpu.matmul %29, %30, %cst_18 {dimension_numbers = #tpu.dot_dimension_numbers<[1], [0], [0], [1], [0, 0, 1, 1], [], []>} : vector<16x16xf32>, vector<16x128xf32>, vector<16x128xf32> -> vector<16x128xf32>
      %c0_19 = arith.constant 0 : index
      %c0_20 = arith.constant 0 : index
      %32 = vector.load %arg8[%c0_19, %c0_20] : memref<16x128xf32, #tpu.memory_space<vmem>>, vector<16x128xf32>
      tpu.vector_store %arg8[%c0_19, %c0_20], %31 {strides = array<i32>} : memref<16x128xf32, #tpu.memory_space<vmem>>, vector<16x128xf32>,
    } else {
    }
    return
  }
  func.func @transform_0(%arg0: i32) -> (i32, i32) {
    %c0_i32 = arith.constant 0 : i32
    %c0_i32_0 = arith.constant 0 : i32
    return %arg0, %c0_i32 : i32, i32
  }
  func.func @transform_1(%arg0: i32) -> (i32, i32) {
    %c0_i32 = arith.constant 0 : i32
    %c0_i32_0 = arith.constant 0 : i32
    %c0_i32_1 = arith.constant 0 : i32
    return %c0_i32, %c0_i32_0 : i32, i32
  }
  func.func @transform_2(%arg0: i32) -> (i32, i32) {
    %c0_i32 = arith.constant 0 : i32
    %c0_i32_0 = arith.constant 0 : i32
    %c0_i32_1 = arith.constant 0 : i32
    return %c0_i32, %c0_i32_0 : i32, i32
  }
  func.func @transform_3(%arg0: i32) -> (i32, i32) {
    %c0_i32 = arith.constant 0 : i32
    %c0_i32_0 = arith.constant 0 : i32
    %c0_i32_1 = arith.constant 0 : i32
    return %c0_i32, %c0_i32_0 : i32, i32
  }
  func.func @transform_4(%arg0: i32) -> (i32, i32) {
    %c0_i32 = arith.constant 0 : i32
    %c0_i32_0 = arith.constant 0 : i32
    %c0_i32_1 = arith.constant 0 : i32
    return %c0_i32, %c0_i32_0 : i32, i32
  }
  func.func @transform_5(%arg0: i32) -> (i32, i32) {
    %c0_i32 = arith.constant 0 : i32
    %c0_i32_0 = arith.constant 0 : i32
    %c0_i32_1 = arith.constant 0 : i32
    return %c0_i32, %c0_i32_0 : i32, i32
  }
  func.func @transform_6(%arg0: i32) -> (i32, i32) {
    %c0_i32 = arith.constant 0 : i32
    %c0_i32_0 = arith.constant 0 : i32
    return %arg0, %c0_i32 : i32, i32
  }
  func.func @transform_7(%arg0: i32) -> (i32, i32) {
    %c0_i32 = arith.constant 0 : i32
    %c0_i32_0 = arith.constant 0 : i32
    %c0_i32_1 = arith.constant 0 : i32
    return %c0_i32, %c0_i32_0 : i32, i32
  }
}

</mosaic_0001>

<llo_original>
// kernel: tpu_custom_call.1
$region0: #{tpu_custom_call.1}
  #allocation0 [shape = 'u32[]', space=smem, size = 0x4, offset = 0x4, fixed_abs, tag = 'smem constant byte address 0x4 - core index']
  #allocation1 [shape = 'u32[144,128]{1,0:T(1,128)}', space=vmem, size = 0x12000, scoped, tag = 'internal scratch']
  %s0 = inlined_call_operand.vmem [shape: f32[32,8], index: 0, kind: input, shape index: {}]
  %s1 = inlined_call_operand.hbm [shape: bf16[8,32], index: 1, kind: input, shape index: {}]
  %s2 = inlined_call_operand.vmem [shape: f32[1,32], index: 2, kind: input, shape index: {}]
  %s3 = inlined_call_operand.vmem [shape: bf16[32,128], index: 3, kind: input, shape index: {}]
  %s4 = inlined_call_operand.vmem [shape: f32[16,16], index: 4, kind: input, shape index: {}]
  %s5 = inlined_call_operand.vmem [shape: f32[16,128], index: 5, kind: input, shape index: {}]
  %s6 = inlined_call_operand.hbm [shape: f32[32,128], index: 6, kind: output, shape index: {0}]
  %s7 = inlined_call_operand.hbm [shape: f32[16,128], index: 7, kind: output, shape index: {1}]
  %8 = xla_tuple %s6, %s7
  %s9 = sld [smem:[#allocation0]]
  $region50: #{tpu_custom_call.1} parent=0
    _
  %s11 = ssub.s32 1, %s9
  %s12 = scalar_select 0, %s11, %s9
  $region1: #{tpu_custom_call.1} parent=0
    #allocation2 [shape = 'u8[2048]{0}', space=vmem, size = 0x800, scoped, tag = 'input window, operand 1, single buffered']
    #allocation3 [shape = 's32[1]{0}', space=sflag, size = 0x4, scoped, tag = 'scoped memory for tpu_custom_call.1']
    #allocation4 [shape = 's32[1]{0}', space=sflag, size = 0x4, scoped, tag = 'scoped memory for tpu_custom_call.1']
    #allocation5 [shape = 'u8[16384]{0}', space=vmem, size = 0x4000, scoped, tag = 'output window, operand 0, single buffered']
    #allocation6 [shape = 'u8[8192]{0}', space=vmem, size = 0x2000, scoped, tag = 'output window, operand 1, single buffered']
    #allocation7 [shape = 's32[1]{0}', space=sflag, size = 0x4, scoped, tag = 'scoped memory for tpu_custom_call.1']
    %13 = vsyncpa [#allocation3], 0
    %14 = vsyncpa [#allocation4], 0
    %15 = vsyncpa [#allocation7], 0
    // Predicated region
    $region2: #{tpu_custom_call.1} parent=1 // pred_check
      _
    $region3: #{tpu_custom_call.1} parent=1 // pred_check_branch
      %17 = sbr.rel (0) target = $region5
    $region4: #{tpu_custom_call.1} parent=1 // pred_region
      _
    $region5: #{tpu_custom_call.1} parent=1 // pred_fallthru
      _
    // Predicated region
    $region6: #{tpu_custom_call.1} parent=1 // pred_check
      _
    $region7: #{tpu_custom_call.1} parent=1 // pred_check_branch
      %19 = sbr.rel (0) target = $region9
    $region8: #{tpu_custom_call.1} parent=1 // pred_region
      %s21 = ssub.s32 64, 64
      %22 = vsyncadd [#allocation3], %s21
      %s24 = sshll.u32 [#allocation2], 4
      %s25 = int_to_ptr.vmem [resolvable:$true] %s24
      %27 = dma.hbm_to_vmem [thread:$0]  %s1, 64, %s25, [#allocation3]
    $region9: #{tpu_custom_call.1} parent=1 // pred_fallthru
      _
    // Predicated region
    $region10: #{tpu_custom_call.1} parent=1 // pred_check
      _
    $region11: #{tpu_custom_call.1} parent=1 // pred_check_branch
      %29 = sbr.rel (0) target = $region13
    $region12: #{tpu_custom_call.1} parent=1 // pred_region
      _
    $region13: #{tpu_custom_call.1} parent=1 // pred_fallthru
      _
    // Predicated region
    $region14: #{tpu_custom_call.1} parent=1 // pred_check
      _
    $region15: #{tpu_custom_call.1} parent=1 // pred_check_branch
      %31 = sbr.rel (0) target = $region17
    $region16: #{tpu_custom_call.1} parent=1 // pred_region
      _
    $region17: #{tpu_custom_call.1} parent=1 // pred_fallthru
      _
    // Predicated region
    $region18: #{tpu_custom_call.1} parent=1 // pred_check
      _
    $region19: #{tpu_custom_call.1} parent=1 // pred_check_branch
      %33 = sbr.rel (0) target = $region21
    $region20: #{tpu_custom_call.1} parent=1 // pred_region
      _
    $region21: #{tpu_custom_call.1} parent=1 // pred_fallthru
      _
    // Predicated region
    $region22: #{tpu_custom_call.1} parent=1 // pred_check
      _
    $region23: #{tpu_custom_call.1} parent=1 // pred_check_branch
      %35 = sbr.rel (0) target = $region25
    $region24: #{tpu_custom_call.1} parent=1 // pred_region
      _
    $region25: #{tpu_custom_call.1} parent=1 // pred_fallthru
      _
    // Predicated region
    $region26: #{tpu_custom_call.1} parent=1 // pred_check
      _
    $region27: #{tpu_custom_call.1} parent=1 // pred_check_branch
      %37 = sbr.rel (0) target = $region29
    $region28: #{tpu_custom_call.1} parent=1 // pred_region
      %38 = dma.done [#allocation3], 64
    $region29: #{tpu_custom_call.1} parent=1 // pred_fallthru
      _
    %v40 = vld [vmem:[%s0] sm:$0xff]
    %v41 = vld [vmem:[%s0 + $0x8] sm:$0xff]
    %v42 = vld [vmem:[%s0 + $0x10] sm:$0xff]
    %v43 = vld [vmem:[%s0 + $0x18] sm:$0xff]
    %v44 = vpack.c.bf16 %v41, %v40
    %v45 = vpack.c.bf16 %v43, %v42
    %v46 = vld [vmem:[#allocation2] sm:$0xf]
    %v47 = vld [vmem:[%s2] sm:$0x1]
    %v49 = vlaneseq
    %v50 = vshrl.u32 %v49, 7
    %v51 = vsub.s32 0, %v50
    %v52 = vrot.slane %v47, %v51
    %vm54 = vcmask 64512
    %v56 = vsel %vm54, %v44, 0
    %v59 = vsel %vm54, %v45, 0
    %vm61 = vcmask 1043456
    %v63 = vsel %vm61, %v46, 0
    %65 = vmatprep.subr.bf16.mxu0 0
    %66 = vmatpush1.bf16.msra.mxu0 %v63
    %67 = vmatprep.subr.bf16.mxu0 0
    %68 = vmatpush1.bf16.msra.mxu0 0
    %69 = vmatprep.subr.bf16.mxu0 0
    %70 = vmatpush1.bf16.msra.mxu0 0
    %71 = vmatprep.subr.bf16.mxu0 0
    %72 = vmatpush1.bf16.msra.mxu0 0
    %73 = vmatprep.subr.bf16.mxu0 0
    %74 = vmatpush1.bf16.msra.mxu0 0
    %75 = vmatprep.subr.bf16.mxu0 0
    %76 = vmatpush1.bf16.msra.mxu0 0
    %77 = vmatprep.subr.bf16.mxu0 0
    %78 = vmatpush1.bf16.msra.mxu0 0
    %79 = vmatprep.subr.bf16.mxu0 0
    %80 = vmatpush1.bf16.msra.mxu0 0
    %81 = vmatprep.subr.bf16.mxu0 0
    %82 = vmatpush1.bf16.msra.mxu0 0
    %83 = vmatprep.subr.bf16.mxu0 0
    %84 = vmatpush1.bf16.msra.mxu0 0
    %85 = vmatprep.subr.bf16.mxu0 0
    %86 = vmatpush1.bf16.msra.mxu0 0
    %87 = vmatprep.subr.bf16.mxu0 0
    %88 = vmatpush1.bf16.msra.mxu0 0
    %89 = vmatprep.subr.bf16.mxu0 0
    %90 = vmatpush1.bf16.msra.mxu0 0
    %91 = vmatprep.subr.bf16.mxu0 0
    %92 = vmatpush1.bf16.msra.mxu0 0
    %93 = vmatprep.subr.bf16.mxu0 0
    %94 = vmatpush1.bf16.msra.mxu0 0
    %95 = vmatprep.subr.bf16.mxu0 0
    %96 = vmatpush1.bf16.msra.mxu0 0
    %97 = vmatprep.mubr.bf16.mxu0 0
    %98 = vmatmul.mubr.bf16.gmra.mrb[0].mxu0 %v56
    %v99 = vpop.f32.mrb[0].mxu0
    %v100 = vadd.f32 %v52, %v99
    %v101 = vpop.f32.mrb[0].mxu0
    %v102 = vpop.f32.mrb[0].mxu0
    %v103 = vadd.f32 %v52, %v102
    %v104 = vpop.f32.mrb[0].mxu0
    %105 = vmatprep.mubr.bf16.mxu0 0
    %106 = vmatmul.mubr.bf16.gmra.mrb[0].mxu0 %v59
    %v107 = vpop.f32.mrb[0].mxu0
    %v108 = vadd.f32 %v52, %v107
    %v109 = vpop.f32.mrb[0].mxu0
    %v110 = vpop.f32.mrb[0].mxu0
    %v111 = vadd.f32 %v52, %v110
    %v112 = vpop.f32.mrb[0].mxu0
    %113 = vdwg.mxu0
    %v114 = vpack.c.bf16 %v103, %v100
    %v115 = vpack.c.bf16 %v111, %v108
    %v116 = vld [vmem:[%s3] sm:$0xf]
    %v117 = vld [vmem:[%s3 + $0x4] sm:$0xf]
    %v118 = vld [vmem:[%s3 + $0x8] sm:$0xf]
    %v119 = vld [vmem:[%s3 + $0xc] sm:$0xf]
    %v124 = vunpack.c.l.b16 %v116
    %v125 = vunpack.c.l.b16 %v117
    %v126 = vunpack.c.l.b16 %v118
    %v127 = vunpack.c.l.b16 %v119
    %v128 = vpack.c.b16 %v125, %v124
    %v129 = vpack.c.b16 %v127, %v126
    %vm132 = vcmask 261120
    %v134 = vsel %vm132, %v114, 0
    %v137 = vsel %vm132, %v115, 0
    %139 = vmatprep.subr.bf16.mxu0 0
    %140 = vmatpush1.bf16.msra.mxu0 %v128
    %141 = vmatprep.subr.bf16.mxu0 0
    %142 = vmatpush1.bf16.msra.mxu0 %v129
    %143 = vmatprep.subr.bf16.mxu0 0
    %144 = vmatpush1.bf16.msra.mxu0 0
    %145 = vmatprep.subr.bf16.mxu0 0
    %146 = vmatpush1.bf16.msra.mxu0 0
    %147 = vmatprep.subr.bf16.mxu0 0
    %148 = vmatpush1.bf16.msra.mxu0 0
    %149 = vmatprep.subr.bf16.mxu0 0
    %150 = vmatpush1.bf16.msra.mxu0 0
    %151 = vmatprep.subr.bf16.mxu0 0
    %152 = vmatpush1.bf16.msra.mxu0 0
    %153 = vmatprep.subr.bf16.mxu0 0
    %154 = vmatpush1.bf16.msra.mxu0 0
    %155 = vmatprep.subr.bf16.mxu0 0
    %156 = vmatpush1.bf16.msra.mxu0 0
    %157 = vmatprep.subr.bf16.mxu0 0
    %158 = vmatpush1.bf16.msra.mxu0 0
    %159 = vmatprep.subr.bf16.mxu0 0
    %160 = vmatpush1.bf16.msra.mxu0 0
    %161 = vmatprep.subr.bf16.mxu0 0
    %162 = vmatpush1.bf16.msra.mxu0 0
    %163 = vmatprep.subr.bf16.mxu0 0
    %164 = vmatpush1.bf16.msra.mxu0 0
    %165 = vmatprep.subr.bf16.mxu0 0
    %166 = vmatpush1.bf16.msra.mxu0 0
    %167 = vmatprep.subr.bf16.mxu0 0
    %168 = vmatpush1.bf16.msra.mxu0 0
    %169 = vmatprep.subr.bf16.mxu0 0
    %170 = vmatpush1.bf16.msra.mxu0 0
    %171 = vmatprep.mubr.bf16.mxu0 0
    %172 = vmatmul.mubr.bf16.gmra.mrb[0].mxu0 %v134
    %v173 = vpop.f32.mrb[0].mxu0
    %v174 = vadd.f32 0.0, %v173
    %v175 = vpop.f32.mrb[0].mxu0
    %v176 = vpop.f32.mrb[0].mxu0
    %v177 = vadd.f32 0.0, %v176
    %v178 = vpop.f32.mrb[0].mxu0
    %179 = vmatprep.mubr.bf16.mxu0 0
    %180 = vmatmul.mubr.bf16.gmra.mrb[0].mxu0 %v137
    %v181 = vpop.f32.mrb[0].mxu0
    %v182 = vadd.f32 0.0, %v181
    %v183 = vpop.f32.mrb[0].mxu0
    %v184 = vpop.f32.mrb[0].mxu0
    %v185 = vadd.f32 0.0, %v184
    %v186 = vpop.f32.mrb[0].mxu0
    %187 = vdwg.mxu0
    %v188 = vlaneseq
    %v189 = vand.u32 %v188, 127
    %vm190 = vcmp.lt.s32.totalorder %v189, 8
    %v191 = vsel %vm190, %v174, -1e+30
    %v192 = vsel %vm190, %v177, -1e+30
    %v193 = vsel %vm190, %v182, -1e+30
    %v194 = vsel %vm190, %v185, -1e+30
    %195 = vmax.xlane.f32.xlu0 %v191
    %v196 = vpop.xlane.xlu0 %195
    %197 = vmax.xlane.f32.xlu0 %v192
    %v198 = vpop.xlane.xlu0 %197
    %199 = vmax.xlane.f32.xlu0 %v193
    %v200 = vpop.xlane.xlu0 %199
    %201 = vmax.xlane.f32.xlu0 %v194
    %v202 = vpop.xlane.xlu0 %201
    %v203 = vsub.f32 %v191, %v196
    %v204 = vsub.f32 %v192, %v198
    %v205 = vsub.f32 %v193, %v200
    %v206 = vsub.f32 %v194, %v202
    %v207 = vmul.f32 %v203, 1.442695
    %v208 = vpow.pop %v207
    %v209 = vmul.f32 %v204, 1.442695
    %v210 = vpow.pop %v209
    %v211 = vmul.f32 %v205, 1.442695
    %v212 = vpow.pop %v211
    %v213 = vmul.f32 %v206, 1.442695
    %v214 = vpow.pop %v213
    %215 = vadd.xlane.f32.xlu0 %v208
    %v216 = vpop.xlane.xlu0 %215
    %217 = vadd.xlane.f32.xlu0 %v210
    %v218 = vpop.xlane.xlu0 %217
    %219 = vadd.xlane.f32.xlu0 %v212
    %v220 = vpop.xlane.xlu0 %219
    %221 = vadd.xlane.f32.xlu0 %v214
    %v222 = vpop.xlane.xlu0 %221
    %v223 = vrcp.pop %v216
    %v224 = vrcp.pop %v218
    %v225 = vrcp.pop %v220
    %v226 = vrcp.pop %v222
    %v227 = vmul.f32 %v208, %v223
    %v228 = vmul.f32 %v210, %v224
    %v229 = vmul.f32 %v212, %v225
    %v230 = vmul.f32 %v214, %v226
    %231 = vst [vmem:[#allocation5] sm:$0xff] %v227
    %232 = vst [vmem:[#allocation5 + $0x8] sm:$0xff] %v228
    %233 = vst [vmem:[#allocation5 + $0x10] sm:$0xff] %v229
    %234 = vst [vmem:[#allocation5 + $0x18] sm:$0xff] %v230
    %p235 = scmp.eq.s32.totalorder 0, 0
    // Predicated region
    $region30: #{tpu_custom_call.1} parent=1 // pred_check
      %p236 = pneg %p235
    $region31: #{tpu_custom_call.1} parent=1 // pred_check_branch
      %238 = sbr.rel (%p236) target = $region33
    $region32: #{tpu_custom_call.1} parent=1 // pred_region
      %v239 = vld [vmem:[%s4] sm:$0xff]
      %v240 = vld [vmem:[%s4 + $0x8] sm:$0xff]
      %v241 = vld [vmem:[%s5] sm:$0xff]
      %v242 = vld [vmem:[%s5 + $0x8] sm:$0xff]
      %vm243 = vcmask 130048
      %v245 = vsel %vm243, %v239, 0
      %v248 = vsel %vm243, %v240, 0
      %250 = vmatprep.subr.mxu0 0.0
      %251 = vmatpush1.msra.mxu0 %v241
      %252 = vmatprep.subr.mxu0 0.0
      %253 = vmatpush1.msra.mxu0 %v242
      %254 = vmatprep.subr.mxu0 0.0
      %255 = vmatpush1.msra.mxu0 0.0
      %256 = vmatprep.subr.mxu0 0.0
      %257 = vmatpush1.msra.mxu0 0.0
      %258 = vmatprep.subr.mxu0 0.0
      %259 = vmatpush1.msra.mxu0 0.0
      %260 = vmatprep.subr.mxu0 0.0
      %261 = vmatpush1.msra.mxu0 0.0
      %262 = vmatprep.subr.mxu0 0.0
      %263 = vmatpush1.msra.mxu0 0.0
      %264 = vmatprep.subr.mxu0 0.0
      %265 = vmatpush1.msra.mxu0 0.0
      %266 = vmatprep.subr.mxu0 0.0
      %267 = vmatpush1.msra.mxu0 0.0
      %268 = vmatprep.subr.mxu0 0.0
      %269 = vmatpush1.msra.mxu0 0.0
      %270 = vmatprep.subr.mxu0 0.0
      %271 = vmatpush1.msra.mxu0 0.0
      %272 = vmatprep.subr.mxu0 0.0
      %273 = vmatpush1.msra.mxu0 0.0
      %274 = vmatprep.subr.mxu0 0.0
      %275 = vmatpush1.msra.mxu0 0.0
      %276 = vmatprep.subr.mxu0 0.0
      %277 = vmatpush1.msra.mxu0 0.0
      %278 = vmatprep.subr.mxu0 0.0
      %279 = vmatpush1.msra.mxu0 0.0
      %280 = vmatprep.subr.mxu0 0.0
      %281 = vmatpush1.msra.mxu0 0.0
      %282 = vmatprep.subr.mxu0 0.0
      %283 = vmatpush1.msra.mxu0 0.0
      %284 = vmatprep.subr.mxu0 0.0
      %285 = vmatpush1.msra.mxu0 0.0
      %286 = vmatprep.subr.mxu0 0.0
      %287 = vmatpush1.msra.mxu0 0.0
      %288 = vmatprep.subr.mxu0 0.0
      %289 = vmatpush1.msra.mxu0 0.0
      %290 = vmatprep.subr.mxu0 0.0
      %291 = vmatpush1.msra.mxu0 0.0
      %292 = vmatprep.subr.mxu0 0.0
      %293 = vmatpush1.msra.mxu0 0.0
      %294 = vmatprep.subr.mxu0 0.0
      %295 = vmatpush1.msra.mxu0 0.0
      %296 = vmatprep.subr.mxu0 0.0
      %297 = vmatpush1.msra.mxu0 0.0
      %298 = vmatprep.subr.mxu0 0.0
      %299 = vmatpush1.msra.mxu0 0.0
      %300 = vmatprep.subr.mxu0 0.0
      %301 = vmatpush1.msra.mxu0 0.0
      %302 = vmatprep.subr.mxu0 0.0
      %303 = vmatpush1.msra.mxu0 0.0
      %304 = vmatprep.subr.mxu0 0.0
      %305 = vmatpush1.msra.mxu0 0.0
      %306 = vmatprep.subr.mxu0 0.0
      %307 = vmatpush1.msra.mxu0 0.0
      %308 = vmatprep.subr.mxu0 0.0
      %309 = vmatpush1.msra.mxu0 0.0
      %310 = vmatprep.subr.mxu0 0.0
      %311 = vmatpush1.msra.mxu0 0.0
      %312 = vmatprep.subr.mxu0 0.0
      %313 = vmatpush1.msra.mxu0 0.0
      %314 = vmatprep.mubr.f32.mxu0 0.0
      %315 = vmatmul.mubr.f32.gmra.mrb[0].mxu0 %v245
      %v316 = vpop.f32.mrb[0].mxu0
      %v317 = vadd.f32 0.0, %v316
      %v318 = vpop.f32.mrb[0].mxu0
      %319 = vmatprep.mubr.f32.mxu0 0.0
      %320 = vmatmul.mubr.f32.gmra.mrb[0].mxu0 %v248
      %v321 = vpop.f32.mrb[0].mxu0
      %v322 = vadd.f32 0.0, %v321
      %v323 = vpop.f32.mrb[0].mxu0
      %324 = vdwg.mxu0
      %325 = vst [vmem:[#allocation6] sm:$0xff] %v317
      %326 = vst [vmem:[#allocation6 + $0x8] sm:$0xff] %v322
    $region33: #{tpu_custom_call.1} parent=1 // pred_fallthru
      _
    // Predicated region
    $region34: #{tpu_custom_call.1} parent=1 // pred_check
      _
    $region35: #{tpu_custom_call.1} parent=1 // pred_check_branch
      %328 = sbr.rel (0) target = $region37
    $region36: #{tpu_custom_call.1} parent=1 // pred_region
      %s330 = ssub.s32 512, 512
      %331 = vsyncadd [#allocation4], %s330
      %s332 = sshll.u32 [#allocation5], 4
      %s333 = int_to_ptr.vmem [resolvable:$true] %s332
      %338 = dma.vmem_to_hbm [thread:$0]  %s333, 512, %s6, [#allocation4], 128, 128, 8
    $region37: #{tpu_custom_call.1} parent=1 // pred_fallthru
      _
    // Predicated region
    $region38: #{tpu_custom_call.1} parent=1 // pred_check
      _
    $region39: #{tpu_custom_call.1} parent=1 // pred_check_branch
      %340 = sbr.rel (0) target = $region41
    $region40: #{tpu_custom_call.1} parent=1 // pred_region
      %s342 = ssub.s32 256, 256
      %343 = vsyncadd [#allocation7], %s342
      %s344 = sshll.u32 [#allocation6], 4
      %s345 = int_to_ptr.vmem [resolvable:$true] %s344
      %350 = dma.vmem_to_hbm [thread:$0]  %s345, 256, %s7, [#allocation7], 128, 128, 8
    $region41: #{tpu_custom_call.1} parent=1 // pred_fallthru
      _
    // Predicated region
    $region42: #{tpu_custom_call.1} parent=1 // pred_check
      _
    $region43: #{tpu_custom_call.1} parent=1 // pred_check_branch
      %352 = sbr.rel (0) target = $region45
    $region44: #{tpu_custom_call.1} parent=1 // pred_region
      %353 = dma.done [#allocation4], 512
    $region45: #{tpu_custom_call.1} parent=1 // pred_fallthru
      _
    // Predicated region
    $region46: #{tpu_custom_call.1} parent=1 // pred_check
      _
    $region47: #{tpu_custom_call.1} parent=1 // pred_check_branch
      %355 = sbr.rel (0) target = $region49
    $region48: #{tpu_custom_call.1} parent=1 // pred_region
      %356 = dma.done [#allocation7], 256
    $region49: #{tpu_custom_call.1} parent=1 // pred_fallthru
      _
    %357 = vsyncpa [#allocation3], 1
    %358 = vsyncpa [#allocation4], 1
    %359 = vsyncpa [#allocation7], 1

</llo_original>
